<compile_context>
chip_gen: v7x
topology: tpu7x:2x2x1
jax: 0.10.0
libtpu: 0.0.40
codegen_flags: <defaults>
</compile_context>

<pallas_src>
import jax
import jax.numpy as jnp
from jax.experimental import pallas as pl
from jax.experimental.pallas import tpu as pltpu


def _decoder_kernel(x_ref, w1_ref, b1_ref, w2_ref, b2_ref, w3_ref, b3_ref, o_ref):
    # tran_1: (tb, h_dim) @ (h_dim, 40) + b1, ReLU     (bf16 MXU inputs, f32 accumulate)
    h = jnp.dot(x_ref[...], w1_ref[...], preferred_element_type=jnp.float32)
    h = jnp.maximum(h + b1_ref[...], 0.0)
    # tran_2: (tb, 40) @ (40, 60) + b2, ReLU
    h = jnp.dot(h.astype(jnp.bfloat16), w2_ref[...], preferred_element_type=jnp.float32)
    h = jnp.maximum(h + b2_ref[...], 0.0)
    # tran_3: (tb, 60) @ (60, sens_pad) + b3, Sigmoid  (lane-dense 128-wide output tile)
    h = jnp.dot(h.astype(jnp.bfloat16), w3_ref[...], preferred_element_type=jnp.float32)
    o_ref[...] = jax.nn.sigmoid(h + b3_ref[...]).astype(o_ref.dtype)


def decoder_s_pallas(x, params, *, tile_b=512):
    """x: (B, h_dim) float32.  Returns (B, sensors) float32."""
    w1, b1, w2, b2, w3, b3 = params
    B, h_dim = x.shape
    sensors = w3.shape[1]

    # --- lane-dense output: pad W3/b3 to a multiple of 128 columns (zeros -> sliced off later) ---
    LANES = 128
    sens_pad = ((sensors + LANES - 1) // LANES) * LANES
    w3p = jnp.zeros((w3.shape[0], sens_pad), w3.dtype).at[:, :sensors].set(w3)
    b3p = jnp.zeros((1, sens_pad), b3.dtype).at[:, :sensors].set(b3)

    # --- bf16 MXU inputs (halve HBM->VMEM bytes); biases & accumulation stay f32 ---
    xb = x.astype(jnp.bfloat16)
    w1b = w1.astype(jnp.bfloat16)
    w2b = w2.astype(jnp.bfloat16)
    w3b = w3p.astype(jnp.bfloat16)

    # --- batch tiling: multiple of 8 rows, capped at tile_b; big tiles amortize per-step overhead ---
    tb = min(tile_b, ((B + 7) // 8) * 8)
    grid = (pl.cdiv(B, tb),)

    x_spec = pl.BlockSpec((tb, h_dim), lambda i: (i, 0))
    o_spec = pl.BlockSpec((tb, sens_pad), lambda i: (i, 0))
    # weights/biases: constant block index -> resident in VMEM across all grid steps
    resident = lambda shape: pl.BlockSpec(shape, lambda i: (0, 0))

    flops = 2 * B * (h_dim * 40 + 40 * 60 + 60 * sens_pad)
    bytes_accessed = (xb.size * 2 + w1b.size * 2 + w2b.size * 2 + w3b.size * 2
                      + b1.size * 4 + b2.size * 4 + b3p.size * 4 + B * sens_pad * 4)
    cost = pl.CostEstimate(flops=flops, transcendentals=B * sens_pad,
                           bytes_accessed=bytes_accessed)

    out = pl.pallas_call(
        _decoder_kernel,
        out_shape=jax.ShapeDtypeStruct((B, sens_pad), jnp.float32),
        grid=grid,
        in_specs=[
            x_spec,
            resident(w1b.shape), resident(b1.shape),
            resident(w2b.shape), resident(b2.shape),
            resident(w3b.shape), resident(b3p.shape),
        ],
        out_specs=o_spec,
        compiler_params=pltpu.CompilerParams(
            dimension_semantics=("parallel",),   # megacore sharding of the batch axis (v7x)
            vmem_limit_bytes=32 * 1024 * 1024,   # explicit budget; tiles here are <1 MiB anyway
        ),
        cost_estimate=cost,
    )(xb, w1b, b1, w2b, b2, w3b, b3p)

    return out[:, :sensors]


def init_params(key, h_dim=20, sensors=16):
    """Deterministic init mimicking torch ConvTranspose1d default (uniform +/-1/sqrt(fan_in))."""
    ks = jax.random.split(key, 6)

    def uniform(k, shape, fan_in):
        bound = 1.0 / jnp.sqrt(fan_in)
        return jax.random.uniform(k, shape, jnp.float32, -bound, bound)

    # ConvTranspose1d weight is (in_ch, out_ch, 1); we store the (in_ch, out_ch) matrix.
    w1 = uniform(ks[0], (h_dim, 40), h_dim)
    b1 = uniform(ks[1], (1, 40), h_dim)
    w2 = uniform(ks[2], (40, 60), 40)
    b2 = uniform(ks[3], (1, 60), 40)
    w3 = uniform(ks[4], (60, sensors), 60)
    b3 = uniform(ks[5], (1, sensors), 60)
    return (w1, b1, w2, b2, w3, b3)


def decoder_s_reference(x, params):
    """Pure-JAX f32 reference of DecoderS.forward for verification."""
    w1, b1, w2, b2, w3, b3 = params
    h = jnp.maximum(x @ w1 + b1, 0.0)
    h = jnp.maximum(h @ w2 + b2, 0.0)
    return jax.nn.sigmoid(h @ w3 + b3)


if __name__ == "__main__":
    key = jax.random.PRNGKey(0)
    k_x, k_p = jax.random.split(key)

    B, h_dim, sensors = 8, 20, 16
    x = jax.random.normal(k_x, (B, h_dim), jnp.float32)
    params = init_params(k_p, h_dim=h_dim, sensors=sensors)

    out = decoder_s_pallas(x, params)
    out = jax.block_until_ready(out)

    ref = decoder_s_reference(x, params)
    assert out.shape == (B, sensors)
    # bf16 MXU inputs with f32 accumulation: relaxed tolerance vs the pure-f32 reference.
    assert jnp.allclose(out, ref, atol=2e-2, rtol=2e-2), "mismatch vs reference"

    print("KERNEL_OK")
</pallas_src>

<mosaic_0001>
module attributes {stable_mosaic.version = 11 : i64} {
  func.func @_decoder_kernel(%arg0: i32, %arg1: memref<8x20xbf16, #tpu.memory_space<vmem>>, %arg2: memref<20x40xbf16, #tpu.memory_space<vmem>>, %arg3: memref<1x40xf32, #tpu.memory_space<vmem>>, %arg4: memref<40x60xbf16, #tpu.memory_space<vmem>>, %arg5: memref<1x60xf32, #tpu.memory_space<vmem>>, %arg6: memref<60x128xbf16, #tpu.memory_space<vmem>>, %arg7: memref<1x128xf32, #tpu.memory_space<vmem>>, %arg8: memref<8x128xf32, #tpu.memory_space<vmem>>) attributes {dimension_semantics = [#tpu.dimension_semantics<parallel>], iteration_bounds = array<i64: 1>, scalar_prefetch = 0 : i64, scratch_operands = 0 : i64, tpu.core_type = #tpu.core_type<tc>, window_params = [{transform_indices = @transform_0, window_bounds = array<i64: 8, 20>}, {pipeline_mode = #tpu.pipeline_mode<synchronous>, transform_indices = @transform_1, window_bounds = array<i64: 20, 40>}, {pipeline_mode = #tpu.pipeline_mode<synchronous>, transform_indices = @transform_2, window_bounds = array<i64: 1, 40>}, {pipeline_mode = #tpu.pipeline_mode<synchronous>, transform_indices = @transform_3, window_bounds = array<i64: 40, 60>}, {pipeline_mode = #tpu.pipeline_mode<synchronous>, transform_indices = @transform_4, window_bounds = array<i64: 1, 60>}, {pipeline_mode = #tpu.pipeline_mode<synchronous>, transform_indices = @transform_5, window_bounds = array<i64: 60, 128>}, {pipeline_mode = #tpu.pipeline_mode<synchronous>, transform_indices = @transform_6, window_bounds = array<i64: 1, 128>}, {transform_indices = @transform_7, window_bounds = array<i64: 8, 128>}]} {
    %c0 = arith.constant 0 : index
    %c0_0 = arith.constant 0 : index
    %0 = vector.load %arg1[%c0, %c0_0] : memref<8x20xbf16, #tpu.memory_space<vmem>>, vector<8x20xbf16>
    %c0_1 = arith.constant 0 : index
    %c0_2 = arith.constant 0 : index
    %1 = vector.load %arg2[%c0_1, %c0_2] : memref<20x40xbf16, #tpu.memory_space<vmem>>, vector<20x40xbf16>
    %cst = arith.constant dense<0.000000e+00> : vector<8x40xf32>
    %2 = tpu.matmul %0, %1, %cst {dimension_numbers = #tpu.dot_dimension_numbers<[1], [0], [0], [1], [0, 0, 1, 1], [], []>} : vector<8x20xbf16>, vector<20x40xbf16>, vector<8x40xf32> -> vector<8x40xf32>
    %c0_3 = arith.constant 0 : index
    %c0_4 = arith.constant 0 : index
    %3 = vector.load %arg3[%c0_3, %c0_4] : memref<1x40xf32, #tpu.memory_space<vmem>>, vector<1x40xf32>
    %4 = vector.broadcast %3 : vector<1x40xf32> to vector<8x40xf32>
    %5 = arith.addf %2, %4 : vector<8x40xf32>
    %cst_5 = arith.constant 0.000000e+00 : f32
    %6 = vector.broadcast %cst_5 : f32 to vector<8x40xf32>
    %7 = arith.maximumf %5, %6 : vector<8x40xf32>
    %8 = arith.truncf %7 : vector<8x40xf32> to vector<8x40xbf16>
    %c0_6 = arith.constant 0 : index
    %c0_7 = arith.constant 0 : index
    %9 = vector.load %arg4[%c0_6, %c0_7] : memref<40x60xbf16, #tpu.memory_space<vmem>>, vector<40x60xbf16>
    %cst_8 = arith.constant dense<0.000000e+00> : vector<8x60xf32>
    %10 = tpu.matmul %8, %9, %cst_8 {dimension_numbers = #tpu.dot_dimension_numbers<[1], [0], [0], [1], [0, 0, 1, 1], [], []>} : vector<8x40xbf16>, vector<40x60xbf16>, vector<8x60xf32> -> vector<8x60xf32>
    %c0_9 = arith.constant 0 : index
    %c0_10 = arith.constant 0 : index
    %11 = vector.load %arg5[%c0_9, %c0_10] : memref<1x60xf32, #tpu.memory_space<vmem>>, vector<1x60xf32>
    %12 = vector.broadcast %11 : vector<1x60xf32> to vector<8x60xf32>
    %13 = arith.addf %10, %12 : vector<8x60xf32>
    %cst_11 = arith.constant 0.000000e+00 : f32
    %14 = vector.broadcast %cst_11 : f32 to vector<8x60xf32>
    %15 = arith.maximumf %13, %14 : vector<8x60xf32>
    %16 = arith.truncf %15 : vector<8x60xf32> to vector<8x60xbf16>
    %c0_12 = arith.constant 0 : index
    %c0_13 = arith.constant 0 : index
    %17 = vector.load %arg6[%c0_12, %c0_13] : memref<60x128xbf16, #tpu.memory_space<vmem>>, vector<60x128xbf16>
    %cst_14 = arith.constant dense<0.000000e+00> : vector<8x128xf32>
    %18 = tpu.matmul %16, %17, %cst_14 {dimension_numbers = #tpu.dot_dimension_numbers<[1], [0], [0], [1], [0, 0, 1, 1], [], []>} : vector<8x60xbf16>, vector<60x128xbf16>, vector<8x128xf32> -> vector<8x128xf32>
    %c0_15 = arith.constant 0 : index
    %c0_16 = arith.constant 0 : index
    %19 = vector.load %arg7[%c0_15, %c0_16] : memref<1x128xf32, #tpu.memory_space<vmem>>, vector<1x128xf32>
    %20 = vector.broadcast %19 : vector<1x128xf32> to vector<8x128xf32>
    %21 = arith.addf %18, %20 : vector<8x128xf32>
    %22 = arith.negf %21 : vector<8x128xf32>
    %23 = math.exp %22 : vector<8x128xf32>
    %cst_17 = arith.constant 1.000000e+00 : f32
    %24 = vector.broadcast %cst_17 : f32 to vector<8x128xf32>
    %25 = arith.addf %24, %23 : vector<8x128xf32>
    %26 = arith.divf %24, %25 : vector<8x128xf32>
    %c0_18 = arith.constant 0 : index
    %c0_19 = arith.constant 0 : index
    %27 = vector.load %arg8[%c0_18, %c0_19] : memref<8x128xf32, #tpu.memory_space<vmem>>, vector<8x128xf32>
    tpu.vector_store %arg8[%c0_18, %c0_19], %26 {strides = array<i32>} : memref<8x128xf32, #tpu.memory_space<vmem>>, vector<8x128xf32>,
    return
  }
  func.func @transform_0(%arg0: i32) -> (i32, i32) {
    %c0_i32 = arith.constant 0 : i32
    %c0_i32_0 = arith.constant 0 : i32
    return %arg0, %c0_i32 : i32, i32
  }
  func.func @transform_1(%arg0: i32) -> (i32, i32) {
    %c0_i32 = arith.constant 0 : i32
    %c0_i32_0 = arith.constant 0 : i32
    %c0_i32_1 = arith.constant 0 : i32
    return %c0_i32, %c0_i32_0 : i32, i32
  }
  func.func @transform_2(%arg0: i32) -> (i32, i32) {
    %c0_i32 = arith.constant 0 : i32
    %c0_i32_0 = arith.constant 0 : i32
    %c0_i32_1 = arith.constant 0 : i32
    return %c0_i32, %c0_i32_0 : i32, i32
  }
  func.func @transform_3(%arg0: i32) -> (i32, i32) {
    %c0_i32 = arith.constant 0 : i32
    %c0_i32_0 = arith.constant 0 : i32
    %c0_i32_1 = arith.constant 0 : i32
    return %c0_i32, %c0_i32_0 : i32, i32
  }
  func.func @transform_4(%arg0: i32) -> (i32, i32) {
    %c0_i32 = arith.constant 0 : i32
    %c0_i32_0 = arith.constant 0 : i32
    %c0_i32_1 = arith.constant 0 : i32
    return %c0_i32, %c0_i32_0 : i32, i32
  }
  func.func @transform_5(%arg0: i32) -> (i32, i32) {
    %c0_i32 = arith.constant 0 : i32
    %c0_i32_0 = arith.constant 0 : i32
    %c0_i32_1 = arith.constant 0 : i32
    return %c0_i32, %c0_i32_0 : i32, i32
  }
  func.func @transform_6(%arg0: i32) -> (i32, i32) {
    %c0_i32 = arith.constant 0 : i32
    %c0_i32_0 = arith.constant 0 : i32
    %c0_i32_1 = arith.constant 0 : i32
    return %c0_i32, %c0_i32_0 : i32, i32
  }
  func.func @transform_7(%arg0: i32) -> (i32, i32) {
    %c0_i32 = arith.constant 0 : i32
    %c0_i32_0 = arith.constant 0 : i32
    return %arg0, %c0_i32 : i32, i32
  }
}

</mosaic_0001>

<llo_original>
// kernel: tpu_custom_call.1
$region0: #{tpu_custom_call.1}
  #allocation0 [shape = 'u32[]', space=smem, size = 0x4, offset = 0x4, fixed_abs, tag = 'smem constant byte address 0x4 - core index']
  #allocation1 [shape = 'u32[144,128]{1,0:T(1,128)}', space=vmem, size = 0x12000, scoped, tag = 'internal scratch']
  %s0 = inlined_call_operand.hbm [shape: bf16[8,20], index: 0, kind: input, shape index: {}]
  %s1 = inlined_call_operand.hbm [shape: bf16[20,40], index: 1, kind: input, shape index: {}]
  %s2 = inlined_call_operand.vmem [shape: f32[1,40], index: 2, kind: input, shape index: {}]
  %s3 = inlined_call_operand.hbm [shape: bf16[40,60], index: 3, kind: input, shape index: {}]
  %s4 = inlined_call_operand.vmem [shape: f32[1,60], index: 4, kind: input, shape index: {}]
  %s5 = inlined_call_operand.hbm [shape: bf16[60,128], index: 5, kind: input, shape index: {}]
  %s6 = inlined_call_operand.vmem [shape: f32[1,128], index: 6, kind: input, shape index: {}]
  %s7 = inlined_call_operand.hbm [shape: f32[8,128], index: 7, kind: output, shape index: {}]
  %s8 = sld [smem:[#allocation0]]
  $region54: #{tpu_custom_call.1} parent=0
    _
  %s10 = ssub.s32 1, %s8
  %s11 = scalar_select 0, %s10, %s8
  $region1: #{tpu_custom_call.1} parent=0
    #allocation2 [shape = 'u8[2048]{0}', space=vmem, size = 0x800, scoped, tag = 'input window, operand 0, single buffered']
    #allocation3 [shape = 's32[1]{0}', space=sflag, size = 0x4, scoped, tag = 'scoped memory for tpu_custom_call.1']
    #allocation4 [shape = 's32[1]{0}', space=sflag, size = 0x4, scoped, tag = 'scoped memory for tpu_custom_call.1']
    #allocation5 [shape = 'u8[6144]{0}', space=vmem, size = 0x1800, scoped, tag = 'input window, operand 1, single buffered']
    #allocation6 [shape = 's32[1]{0}', space=sflag, size = 0x4, scoped, tag = 'scoped memory for tpu_custom_call.1']
    #allocation7 [shape = 'u8[10240]{0}', space=vmem, size = 0x2800, scoped, tag = 'input window, operand 3, single buffered']
    #allocation8 [shape = 'u8[16384]{0}', space=vmem, size = 0x4000, scoped, tag = 'input window, operand 5, single buffered']
    #allocation9 [shape = 's32[1]{0}', space=sflag, size = 0x4, scoped, tag = 'scoped memory for tpu_custom_call.1']
    #allocation10 [shape = 'u8[4096]{0}', space=vmem, size = 0x1000, scoped, tag = 'output window, operand 0, single buffered']
    %12 = vsyncpa [#allocation3], 0
    %13 = vsyncpa [#allocation6], 0
    %14 = vsyncpa [#allocation9], 0
    %15 = vsyncpa [#allocation4], 0
    // Predicated region
    $region2: #{tpu_custom_call.1} parent=1 // pred_check
      _
    $region3: #{tpu_custom_call.1} parent=1 // pred_check_branch
      %17 = sbr.rel (0) target = $region5
    $region4: #{tpu_custom_call.1} parent=1 // pred_region
      %s19 = ssub.s32 64, 64
      %20 = vsyncadd [#allocation3], %s19
      %s22 = sshll.u32 [#allocation2], 4
      %s23 = int_to_ptr.vmem [resolvable:$true] %s22
      %25 = dma.hbm_to_vmem [thread:$0]  %s0, 64, %s23, [#allocation3]
    $region5: #{tpu_custom_call.1} parent=1 // pred_fallthru
      _
    // Predicated region
    $region6: #{tpu_custom_call.1} parent=1 // pred_check
      _
    $region7: #{tpu_custom_call.1} parent=1 // pred_check_branch
      %27 = sbr.rel (0) target = $region9
    $region8: #{tpu_custom_call.1} parent=1 // pred_region
      %s29 = ssub.s32 192, 192
      %30 = vsyncadd [#allocation6], %s29
      %s31 = sshll.u32 [#allocation5], 4
      %s32 = int_to_ptr.vmem [resolvable:$true] %s31
      %37 = dma.hbm_to_vmem [thread:$0]  %s1, 192, %s32, [#allocation6], 64, 64, 4
    $region9: #{tpu_custom_call.1} parent=1 // pred_fallthru
      _
    // Predicated region
    $region10: #{tpu_custom_call.1} parent=1 // pred_check
      _
    $region11: #{tpu_custom_call.1} parent=1 // pred_check_branch
      %39 = sbr.rel (0) target = $region13
    $region12: #{tpu_custom_call.1} parent=1 // pred_region
      _
    $region13: #{tpu_custom_call.1} parent=1 // pred_fallthru
      _
    // Predicated region
    $region14: #{tpu_custom_call.1} parent=1 // pred_check
      _
    $region15: #{tpu_custom_call.1} parent=1 // pred_check_branch
      %41 = sbr.rel (0) target = $region17
    $region16: #{tpu_custom_call.1} parent=1 // pred_region
      %s43 = ssub.s32 320, 320
      %44 = vsyncadd [#allocation6], %s43
      %s45 = sshll.u32 [#allocation7], 4
      %s46 = int_to_ptr.vmem [resolvable:$true] %s45
      %51 = dma.hbm_to_vmem [thread:$0]  %s3, 320, %s46, [#allocation6], 64, 64, 4
    $region17: #{tpu_custom_call.1} parent=1 // pred_fallthru
      _
    // Predicated region
    $region18: #{tpu_custom_call.1} parent=1 // pred_check
      _
    $region19: #{tpu_custom_call.1} parent=1 // pred_check_branch
      %53 = sbr.rel (0) target = $region21
    $region20: #{tpu_custom_call.1} parent=1 // pred_region
      _
    $region21: #{tpu_custom_call.1} parent=1 // pred_fallthru
      _
    // Predicated region
    $region22: #{tpu_custom_call.1} parent=1 // pred_check
      _
    $region23: #{tpu_custom_call.1} parent=1 // pred_check_branch
      %55 = sbr.rel (0) target = $region25
    $region24: #{tpu_custom_call.1} parent=1 // pred_region
      %s57 = ssub.s32 512, 512
      %58 = vsyncadd [#allocation9], %s57
      %s59 = sshll.u32 [#allocation8], 4
      %s60 = int_to_ptr.vmem [resolvable:$true] %s59
      %65 = dma.hbm_to_vmem [thread:$0]  %s5, 512, %s60, [#allocation9], 64, 64, 4
    $region25: #{tpu_custom_call.1} parent=1 // pred_fallthru
      _
    // Predicated region
    $region26: #{tpu_custom_call.1} parent=1 // pred_check
      _
    $region27: #{tpu_custom_call.1} parent=1 // pred_check_branch
      %67 = sbr.rel (0) target = $region29
    $region28: #{tpu_custom_call.1} parent=1 // pred_region
      _
    $region29: #{tpu_custom_call.1} parent=1 // pred_fallthru
      _
    // Predicated region
    $region30: #{tpu_custom_call.1} parent=1 // pred_check
      _
    $region31: #{tpu_custom_call.1} parent=1 // pred_check_branch
      %69 = sbr.rel (0) target = $region33
    $region32: #{tpu_custom_call.1} parent=1 // pred_region
      %70 = dma.done [#allocation3], 64
    $region33: #{tpu_custom_call.1} parent=1 // pred_fallthru
      _
    // Predicated region
    $region34: #{tpu_custom_call.1} parent=1 // pred_check
      _
    $region35: #{tpu_custom_call.1} parent=1 // pred_check_branch
      %72 = sbr.rel (0) target = $region37
    $region36: #{tpu_custom_call.1} parent=1 // pred_region
      %73 = dma.done [#allocation6], 192
    $region37: #{tpu_custom_call.1} parent=1 // pred_fallthru
      _
    // Predicated region
    $region38: #{tpu_custom_call.1} parent=1 // pred_check
      _
    $region39: #{tpu_custom_call.1} parent=1 // pred_check_branch
      %75 = sbr.rel (0) target = $region41
    $region40: #{tpu_custom_call.1} parent=1 // pred_region
      %76 = dma.done [#allocation6], 320
    $region41: #{tpu_custom_call.1} parent=1 // pred_fallthru
      _
    // Predicated region
    $region42: #{tpu_custom_call.1} parent=1 // pred_check
      _
    $region43: #{tpu_custom_call.1} parent=1 // pred_check_branch
      %78 = sbr.rel (0) target = $region45
    $region44: #{tpu_custom_call.1} parent=1 // pred_region
      %79 = dma.done [#allocation9], 512
    $region45: #{tpu_custom_call.1} parent=1 // pred_fallthru
      _
    %v81 = vld [vmem:[#allocation2] sm:$0xf]
    %v82 = vld [vmem:[#allocation5] sm:$0xf]
    %v83 = vld [vmem:[#allocation5 + $0x4] sm:$0xf]
    %v84 = vld [vmem:[#allocation5 + $0x8] sm:$0x3]
    %v85 = vld [vmem:[%s2] sm:$0x1]
    %v87 = vlaneseq
    %v88 = vshrl.u32 %v87, 7
    %v89 = vsub.s32 0, %v88
    %v90 = vrot.slane %v85, %v89
    %v95 = vunpack.c.l.b16 %v82
    %v96 = vunpack.c.l.b16 %v83
    %v97 = vunpack.c.l.b16 %v84
    %v98 = vpack.c.b16 %v96, %v95
    %v99 = vpack.c.b16 %v97, %v97
    %vm101 = vcmask 162816
    %v103 = vsel %vm101, %v81, 0
    %vm105 = vcmask 1041408
    %v107 = vsel %vm105, %v99, 0
    %109 = vmatprep.subr.bf16.mxu0 0
    %110 = vmatpush1.bf16.msra.mxu0 %v98
    %111 = vmatprep.subr.bf16.mxu0 0
    %112 = vmatpush1.bf16.msra.mxu0 %v107
    %113 = vmatprep.subr.bf16.mxu0 0
    %114 = vmatpush1.bf16.msra.mxu0 0
    %115 = vmatprep.subr.bf16.mxu0 0
    %116 = vmatpush1.bf16.msra.mxu0 0
    %117 = vmatprep.subr.bf16.mxu0 0
    %118 = vmatpush1.bf16.msra.mxu0 0
    %119 = vmatprep.subr.bf16.mxu0 0
    %120 = vmatpush1.bf16.msra.mxu0 0
    %121 = vmatprep.subr.bf16.mxu0 0
    %122 = vmatpush1.bf16.msra.mxu0 0
    %123 = vmatprep.subr.bf16.mxu0 0
    %124 = vmatpush1.bf16.msra.mxu0 0
    %125 = vmatprep.subr.bf16.mxu0 0
    %126 = vmatpush1.bf16.msra.mxu0 0
    %127 = vmatprep.subr.bf16.mxu0 0
    %128 = vmatpush1.bf16.msra.mxu0 0
    %129 = vmatprep.subr.bf16.mxu0 0
    %130 = vmatpush1.bf16.msra.mxu0 0
    %131 = vmatprep.subr.bf16.mxu0 0
    %132 = vmatpush1.bf16.msra.mxu0 0
    %133 = vmatprep.subr.bf16.mxu0 0
    %134 = vmatpush1.bf16.msra.mxu0 0
    %135 = vmatprep.subr.bf16.mxu0 0
    %136 = vmatpush1.bf16.msra.mxu0 0
    %137 = vmatprep.subr.bf16.mxu0 0
    %138 = vmatpush1.bf16.msra.mxu0 0
    %139 = vmatprep.subr.bf16.mxu0 0
    %140 = vmatpush1.bf16.msra.mxu0 0
    %141 = vmatprep.mubr.bf16.mxu0 0
    %142 = vmatmul.mubr.bf16.gmra.mrb[0].mxu0 %v103
    %v143 = vpop.f32.mrb[0].mxu0
    %v144 = vadd.f32 %v90, %v143
    %v145 = vpop.f32.mrb[0].mxu0
    %v146 = vpop.f32.mrb[0].mxu0
    %v147 = vpop.f32.mrb[0].mxu0
    %148 = vdwg.mxu0
    %v149 = vmax.f32 %v144, 0.0
    %v150 = vpack.c.bf16 %v149, %v149
    %v151 = vld [vmem:[#allocation7] sm:$0xf]
    %v152 = vld [vmem:[#allocation7 + $0x4] sm:$0xf]
    %v153 = vld [vmem:[#allocation7 + $0x8] sm:$0xf]
    %v154 = vld [vmem:[#allocation7 + $0xc] sm:$0xf]
    %v155 = vld [vmem:[#allocation7 + $0x10] sm:$0xf]
    %v156 = vld [vmem:[%s4] sm:$0x1]
    %v158 = vlaneseq
    %v159 = vshrl.u32 %v158, 7
    %v160 = vsub.s32 0, %v159
    %v161 = vrot.slane %v156, %v160
    %v168 = vunpack.c.l.b16 %v151
    %v169 = vunpack.c.l.b16 %v152
    %v170 = vunpack.c.l.b16 %v153
    %v171 = vunpack.c.l.b16 %v154
    %v172 = vunpack.c.l.b16 %v155
    %v173 = vpack.c.b16 %v169, %v168
    %v174 = vpack.c.b16 %v171, %v170
    %v175 = vpack.c.b16 %v172, %v172
    %vm178 = vcmask 326656
    %v180 = vsel %vm178, %v150, 0
    %vm182 = vcmask 1043456
    %v184 = vsel %vm182, %v175, 0
    %186 = vmatprep.subr.bf16.mxu0 0
    %187 = vmatpush1.bf16.msra.mxu0 %v173
    %188 = vmatprep.subr.bf16.mxu0 0
    %189 = vmatpush1.bf16.msra.mxu0 %v174
    %190 = vmatprep.subr.bf16.mxu0 0
    %191 = vmatpush1.bf16.msra.mxu0 %v184
    %192 = vmatprep.subr.bf16.mxu0 0
    %193 = vmatpush1.bf16.msra.mxu0 0
    %194 = vmatprep.subr.bf16.mxu0 0
    %195 = vmatpush1.bf16.msra.mxu0 0
    %196 = vmatprep.subr.bf16.mxu0 0
    %197 = vmatpush1.bf16.msra.mxu0 0
    %198 = vmatprep.subr.bf16.mxu0 0
    %199 = vmatpush1.bf16.msra.mxu0 0
    %200 = vmatprep.subr.bf16.mxu0 0
    %201 = vmatpush1.bf16.msra.mxu0 0
    %202 = vmatprep.subr.bf16.mxu0 0
    %203 = vmatpush1.bf16.msra.mxu0 0
    %204 = vmatprep.subr.bf16.mxu0 0
    %205 = vmatpush1.bf16.msra.mxu0 0
    %206 = vmatprep.subr.bf16.mxu0 0
    %207 = vmatpush1.bf16.msra.mxu0 0
    %208 = vmatprep.subr.bf16.mxu0 0
    %209 = vmatpush1.bf16.msra.mxu0 0
    %210 = vmatprep.subr.bf16.mxu0 0
    %211 = vmatpush1.bf16.msra.mxu0 0
    %212 = vmatprep.subr.bf16.mxu0 0
    %213 = vmatpush1.bf16.msra.mxu0 0
    %214 = vmatprep.subr.bf16.mxu0 0
    %215 = vmatpush1.bf16.msra.mxu0 0
    %216 = vmatprep.subr.bf16.mxu0 0
    %217 = vmatpush1.bf16.msra.mxu0 0
    %218 = vmatprep.mubr.bf16.mxu0 0
    %219 = vmatmul.mubr.bf16.gmra.mrb[0].mxu0 %v180
    %v220 = vpop.f32.mrb[0].mxu0
    %v221 = vadd.f32 %v161, %v220
    %v222 = vpop.f32.mrb[0].mxu0
    %v223 = vpop.f32.mrb[0].mxu0
    %v224 = vpop.f32.mrb[0].mxu0
    %225 = vdwg.mxu0
    %v226 = vmax.f32 %v221, 0.0
    %v227 = vpack.c.bf16 %v226, %v226
    %v228 = vld [vmem:[#allocation8] sm:$0xf]
    %v229 = vld [vmem:[#allocation8 + $0x4] sm:$0xf]
    %v230 = vld [vmem:[#allocation8 + $0x8] sm:$0xf]
    %v231 = vld [vmem:[#allocation8 + $0xc] sm:$0xf]
    %v232 = vld [vmem:[#allocation8 + $0x10] sm:$0xf]
    %v233 = vld [vmem:[#allocation8 + $0x14] sm:$0xf]
    %v234 = vld [vmem:[#allocation8 + $0x18] sm:$0xf]
    %v235 = vld [vmem:[#allocation8 + $0x1c] sm:$0x3]
    %v236 = vld [vmem:[%s6] sm:$0x1]
    %v238 = vlaneseq
    %v239 = vshrl.u32 %v238, 7
    %v240 = vsub.s32 0, %v239
    %v241 = vrot.slane %v236, %v240
    %v251 = vunpack.c.l.b16 %v228
    %v252 = vunpack.c.l.b16 %v229
    %v253 = vunpack.c.l.b16 %v230
    %v254 = vunpack.c.l.b16 %v231
    %v255 = vunpack.c.l.b16 %v232
    %v256 = vunpack.c.l.b16 %v233
    %v257 = vunpack.c.l.b16 %v234
    %v258 = vunpack.c.l.b16 %v235
    %v259 = vpack.c.b16 %v252, %v251
    %v260 = vpack.c.b16 %v254, %v253
    %v261 = vpack.c.b16 %v256, %v255
    %v262 = vpack.c.b16 %v258, %v257
    %vm266 = vcmask 490496
    %v268 = vsel %vm266, %v227, 0
    %vm270 = vcmask 1045504
    %v272 = vsel %vm270, %v262, 0
    %274 = vmatprep.subr.bf16.mxu0 0
    %275 = vmatpush1.bf16.msra.mxu0 %v259
    %276 = vmatprep.subr.bf16.mxu0 0
    %277 = vmatpush1.bf16.msra.mxu0 %v260
    %278 = vmatprep.subr.bf16.mxu0 0
    %279 = vmatpush1.bf16.msra.mxu0 %v261
    %280 = vmatprep.subr.bf16.mxu0 0
    %281 = vmatpush1.bf16.msra.mxu0 %v272
    %282 = vmatprep.subr.bf16.mxu0 0
    %283 = vmatpush1.bf16.msra.mxu0 0
    %284 = vmatprep.subr.bf16.mxu0 0
    %285 = vmatpush1.bf16.msra.mxu0 0
    %286 = vmatprep.subr.bf16.mxu0 0
    %287 = vmatpush1.bf16.msra.mxu0 0
    %288 = vmatprep.subr.bf16.mxu0 0
    %289 = vmatpush1.bf16.msra.mxu0 0
    %290 = vmatprep.subr.bf16.mxu0 0
    %291 = vmatpush1.bf16.msra.mxu0 0
    %292 = vmatprep.subr.bf16.mxu0 0
    %293 = vmatpush1.bf16.msra.mxu0 0
    %294 = vmatprep.subr.bf16.mxu0 0
    %295 = vmatpush1.bf16.msra.mxu0 0
    %296 = vmatprep.subr.bf16.mxu0 0
    %297 = vmatpush1.bf16.msra.mxu0 0
    %298 = vmatprep.subr.bf16.mxu0 0
    %299 = vmatpush1.bf16.msra.mxu0 0
    %300 = vmatprep.subr.bf16.mxu0 0
    %301 = vmatpush1.bf16.msra.mxu0 0
    %302 = vmatprep.subr.bf16.mxu0 0
    %303 = vmatpush1.bf16.msra.mxu0 0
    %304 = vmatprep.subr.bf16.mxu0 0
    %305 = vmatpush1.bf16.msra.mxu0 0
    %306 = vmatprep.mubr.bf16.mxu0 0
    %307 = vmatmul.mubr.bf16.gmra.mrb[0].mxu0 %v268
    %v308 = vpop.f32.mrb[0].mxu0
    %v309 = vadd.f32 %v241, %v308
    %v310 = vpop.f32.mrb[0].mxu0
    %v311 = vpop.f32.mrb[0].mxu0
    %v312 = vpop.f32.mrb[0].mxu0
    %313 = vdwg.mxu0
    %v314 = vxor.u32 %v309, 2147483648
    %v315 = vmul.f32 %v314, 1.442695
    %v316 = vpow.pop %v315
    %v317 = vadd.f32 %v316, 1.0
    %v318 = vrcp.pop %v317
    %v319 = vmul.f32 1.0, %v318
    %320 = vst [vmem:[#allocation10] sm:$0xff] %v319
    // Predicated region
    $region46: #{tpu_custom_call.1} parent=1 // pred_check
      _
    $region47: #{tpu_custom_call.1} parent=1 // pred_check_branch
      %322 = sbr.rel (0) target = $region49
    $region48: #{tpu_custom_call.1} parent=1 // pred_region
      %s324 = ssub.s32 128, 128
      %325 = vsyncadd [#allocation4], %s324
      %s327 = sshll.u32 [#allocation10], 4
      %s328 = int_to_ptr.vmem [resolvable:$true] %s327
      %330 = dma.vmem_to_hbm [thread:$0]  %s328, 128, %s7, [#allocation4]
    $region49: #{tpu_custom_call.1} parent=1 // pred_fallthru
      _
    // Predicated region
    $region50: #{tpu_custom_call.1} parent=1 // pred_check
      _
    $region51: #{tpu_custom_call.1} parent=1 // pred_check_branch
      %332 = sbr.rel (0) target = $region53
    $region52: #{tpu_custom_call.1} parent=1 // pred_region
      %333 = dma.done [#allocation4], 128
    $region53: #{tpu_custom_call.1} parent=1 // pred_fallthru
      _
    %334 = vsyncpa [#allocation3], 1
    %335 = vsyncpa [#allocation6], 1
    %336 = vsyncpa [#allocation9], 1
    %337 = vsyncpa [#allocation4], 1

</llo_original>
